<compile_context>
chip_gen: v5e
topology: v5e:2x2
jax: 0.10.0
libtpu: 0.0.40
codegen_flags: <defaults>
</compile_context>

<pallas_src>
import functools

import jax
import jax.numpy as jnp
from jax.experimental import pallas as pl
from jax.experimental.pallas import tpu as pltpu


def mlp_kernel(x_ref, w_ref, o_ref):
    # x_ref : [1, N_pad]  batch on the 128-lane axis
    # w_ref : [H, 2]      fused weights: column 0 = w1 (hidden), column 1 = w2^T (output)
    # o_ref : [1, N_pad]
    w = w_ref[...]                         # single [H, 2] load
    w1 = w[:, 0:1]                         # [H, 1] static slice (free)
    w2 = w[:, 1:2]                         # [H, 1] static slice (free)
    h = jnp.maximum(w1 * x_ref[...], 0.0)                  # VPU outer product + ReLU -> [H, N_pad]
    o_ref[...] = jnp.sum(h * w2, axis=0, keepdims=True)    # XLU sublane reduce       -> [1, N_pad]


def fuse_weights(w1, w2):
    """One-time init transform (NOT in the hot path).

    w1: [num_hidden, 1]  (PyTorch nn.Linear weight, [out, in])
    w2: [1, num_hidden]
    returns [num_hidden, 2] with w1 in column 0 and w2.T in column 1.
    """
    return jnp.concatenate([w1, w2.T], axis=1)


@functools.partial(jax.jit)
def simple_net_forward(x, w_fused):
    """Forward pass of simple_net.

    x       : [N, 1]            (batch of scalars, PyTorch layout)
    w_fused : [num_hidden, 2]   (from fuse_weights)
    returns [N, 1]
    """
    n = x.shape[0]
    n_pad = ((n + 127) // 128) * 128   # lane-align the batch; padded lanes compute zeros
    h = w_fused.shape[0]

    # Batch on the lane axis, zero-padded via a plain pad (cheaper than zeros + scatter).
    # Padded entries give relu(w1*0)*w2 = 0 and are sliced off below.
    x_lane = jnp.pad(x[:, 0], (0, n_pad - n)).reshape(1, n_pad)

    out_lane = pl.pallas_call(
        mlp_kernel,
        out_shape=jax.ShapeDtypeStruct((1, n_pad), x.dtype),
        # Whole-array VMEM residents, single grid point: total data < 2 KB, so any
        # grid / pipelining would be pure overhead.  (If the batch ever scales up,
        # tile n_pad on the lane axis, mark it "parallel", and re-derive the tile
        # for v7x's 64 MiB VMEM.)
        in_specs=[
            pl.BlockSpec(memory_space=pltpu.MemorySpace.VMEM),   # x_lane  [1, n_pad]
            pl.BlockSpec(memory_space=pltpu.MemorySpace.VMEM),   # w_fused [H, 2]
        ],
        out_specs=pl.BlockSpec(memory_space=pltpu.MemorySpace.VMEM),
        cost_estimate=pl.CostEstimate(
            flops=4 * h * n_pad,                  # mul+relu + mul+reduce
            transcendentals=0,
            bytes_accessed=(2 * h + 2 * n_pad) * 4,
        ),
        compiler_params=pltpu.CompilerParams(vmem_limit_bytes=4 << 20),
    )(x_lane, w_fused)

    # Back to the PyTorch [N, 1] layout (layout plumbing only).
    return out_lane[0, :n].reshape(n, 1)


def reference_forward(x, w1, w2):
    # Matches PyTorch: relu(x @ w1.T) @ w2.T with weights stored [out, in].
    return jnp.maximum(x @ w1.T, 0.0) @ w2.T


if __name__ == "__main__":
    num_input = 1
    num_hidden = 32
    n = 100  # torch.linspace(-1, 1, 100).unsqueeze(1)

    # Input: same values the PyTorch script builds.
    x = jnp.linspace(-1.0, 1.0, n, dtype=jnp.float32).reshape(n, 1)

    # Deterministic parameter init (mimics nn.Linear's U(-1/sqrt(fan_in), +1/sqrt(fan_in))).
    key = jax.random.PRNGKey(0)
    k1, k2 = jax.random.split(key)
    bound1 = 1.0 / (num_input ** 0.5)
    bound2 = 1.0 / (num_hidden ** 0.5)
    # PyTorch stores Linear weights as [out, in].
    w1 = jax.random.uniform(k1, (num_hidden, num_input), jnp.float32, -bound1, bound1)
    w2 = jax.random.uniform(k2, (1, num_hidden), jnp.float32, -bound2, bound2)

    # Fuse the constant weights ONCE at init (not per call).
    w_fused = fuse_weights(w1, w2)

    out = simple_net_forward(x, w_fused)
    out = jax.block_until_ready(out)

    ref = reference_forward(x, w1, w2)
    assert out.shape == (n, 1), out.shape
    assert jnp.allclose(out, ref, atol=1e-5, rtol=1e-5), "mismatch vs reference"

    print("KERNEL_OK")
</pallas_src>

<mosaic_0001>
module attributes {stable_mosaic.version = 11 : i64} {
  func.func @mlp_kernel(%arg0: memref<1x128xf32, #tpu.memory_space<vmem>>, %arg1: memref<32x2xf32, #tpu.memory_space<vmem>>, %arg2: memref<1x128xf32, #tpu.memory_space<vmem>>) attributes {dimension_semantics = [], scalar_prefetch = 0 : i64, scratch_operands = 0 : i64, tpu.core_type = #tpu.core_type<tc>} {
    %c0 = arith.constant 0 : index
    %c0_0 = arith.constant 0 : index
    %0 = vector.load %arg1[%c0, %c0_0] : memref<32x2xf32, #tpu.memory_space<vmem>>, vector<32x2xf32>
    %1 = vector.extract_strided_slice %0 {offsets = [0, 0], sizes = [32, 1], strides = [1, 1]} : vector<32x2xf32> to vector<32x1xf32>
    %2 = vector.extract_strided_slice %0 {offsets = [0, 1], sizes = [32, 1], strides = [1, 1]} : vector<32x2xf32> to vector<32x1xf32>
    %c0_1 = arith.constant 0 : index
    %c0_2 = arith.constant 0 : index
    %3 = vector.load %arg0[%c0_1, %c0_2] : memref<1x128xf32, #tpu.memory_space<vmem>>, vector<1x128xf32>
    %4 = vector.broadcast %1 : vector<32x1xf32> to vector<32x128xf32>
    %5 = vector.broadcast %3 : vector<1x128xf32> to vector<32x128xf32>
    %6 = arith.mulf %4, %5 : vector<32x128xf32>
    %cst = arith.constant 0.000000e+00 : f32
    %7 = vector.broadcast %cst : f32 to vector<32x128xf32>
    %8 = arith.maximumf %6, %7 : vector<32x128xf32>
    %9 = vector.broadcast %2 : vector<32x1xf32> to vector<32x128xf32>
    %10 = arith.mulf %8, %9 : vector<32x128xf32>
    %cst_3 = arith.constant dense<0.000000e+00> : vector<128xf32>
    %11 = vector.multi_reduction <add>, %10, %cst_3 [0] : vector<32x128xf32> to vector<128xf32>
    %12 = vector.shape_cast %11 : vector<128xf32> to vector<1x128xf32>
    %c0_4 = arith.constant 0 : index
    %c0_5 = arith.constant 0 : index
    %13 = vector.load %arg2[%c0_4, %c0_5] : memref<1x128xf32, #tpu.memory_space<vmem>>, vector<1x128xf32>
    tpu.vector_store %arg2[%c0_4, %c0_5], %12 {strides = array<i32>} : memref<1x128xf32, #tpu.memory_space<vmem>>, vector<1x128xf32>,
    return
  }
}

</mosaic_0001>

<llo_original>
// kernel: simple_net_forward.1
$region0: #{simple_net_forward.1}
  #allocation0 [shape = 'u32[]', space=smem, size = 0x4, offset = 0x4, fixed_abs, tag = 'smem constant byte address 0x4 - core index']
  #allocation1 [shape = 'u32[72,128]{1,0:T(1,128)}', space=vmem, size = 0x9000, scoped, tag = 'internal scratch']
  %s0 = inlined_call_operand.vmem [shape: f32[1,128], index: 0, kind: input, shape index: {}]
  %s1 = inlined_call_operand.vmem [shape: f32[32,2], index: 1, kind: input, shape index: {}]
  %s2 = inlined_call_operand.vmem [shape: f32[1,128], index: 2, kind: output, shape index: {}]
  %s3 = sld [smem:[#allocation0]]
  $region18: #{simple_net_forward.1} parent=0
    _
  %s5 = ssub.s32 1, %s3
  %s6 = scalar_select 0, %s5, %s3
  // Predicated region
  $region2: #{simple_net_forward.1} parent=0 // pred_check
    _
  $region3: #{simple_net_forward.1} parent=0 // pred_check_branch
    %8 = sbr.rel (0) target = $region5
  $region4: #{simple_net_forward.1} parent=0 // pred_region
    _
  $region5: #{simple_net_forward.1} parent=0 // pred_fallthru
    _
  // Predicated region
  $region6: #{simple_net_forward.1} parent=0 // pred_check
    _
  $region7: #{simple_net_forward.1} parent=0 // pred_check_branch
    %10 = sbr.rel (0) target = $region9
  $region8: #{simple_net_forward.1} parent=0 // pred_region
    _
  $region9: #{simple_net_forward.1} parent=0 // pred_fallthru
    _
  %v11 = vld [vmem:[%s1] sm:$0xff]
  %v12 = vld [vmem:[%s1 + $0x8] sm:$0xff]
  %v13 = vld [vmem:[%s1 + $0x10] sm:$0xff]
  %v14 = vld [vmem:[%s1 + $0x18] sm:$0xff]
  %v15 = vld [vmem:[%s0] sm:$0x1]
  %17 = vset.pattern.permute.xlu0 0
  %18 = vperm.xlu0 %17, %v11
  %v19 = vpop.permute.xlu0 %18
  %22 = vset.pattern.permute.xlu0 0
  %23 = vperm.xlu0 %22, %v12
  %v24 = vpop.permute.xlu0 %23
  %27 = vset.pattern.permute.xlu0 0
  %28 = vperm.xlu0 %27, %v13
  %v29 = vpop.permute.xlu0 %28
  %32 = vset.pattern.permute.xlu0 0
  %33 = vperm.xlu0 %32, %v14
  %v34 = vpop.permute.xlu0 %33
  %v37 = vperm.slane %v15, 0
  %v39 = vmul.f32 %v19, %v37
  %v40 = vmul.f32 %v24, %v37
  %v41 = vmul.f32 %v29, %v37
  %v42 = vmul.f32 %v34, %v37
  %v43 = vmax.f32 %v39, 0.0
  %v44 = vmax.f32 %v40, 0.0
  %v45 = vmax.f32 %v41, 0.0
  %v46 = vmax.f32 %v42, 0.0
  %47 = vset.pattern.permute.xlu0 1
  %48 = vperm.xlu0 %47, %v11
  %v49 = vpop.permute.xlu0 %48
  %51 = vset.pattern.permute.xlu0 1
  %52 = vperm.xlu0 %51, %v12
  %v53 = vpop.permute.xlu0 %52
  %55 = vset.pattern.permute.xlu0 1
  %56 = vperm.xlu0 %55, %v13
  %v57 = vpop.permute.xlu0 %56
  %59 = vset.pattern.permute.xlu0 1
  %60 = vperm.xlu0 %59, %v14
  %v61 = vpop.permute.xlu0 %60
  %v63 = vmul.f32 %v43, %v49
  %v64 = vmul.f32 %v44, %v53
  %v65 = vmul.f32 %v45, %v57
  %v66 = vmul.f32 %v46, %v61
  %v67 = vadd.f32 %v63, %v64
  %v68 = vadd.f32 %v67, %v65
  %v69 = vadd.f32 %v68, %v66
  %v70 = vrot.slane %v69, 4
  %v71 = vadd.f32 %v69, %v70
  %v72 = vrot.slane %v71, 2
  %v73 = vadd.f32 %v71, %v72
  %v74 = vrot.slane %v73, 1
  %v75 = vadd.f32 %v73, %v74
  %76 = vst [vmem:[%s2] sm:$0x1] %v75
  // Predicated region
  $region10: #{simple_net_forward.1} parent=0 // pred_check
    _
  $region11: #{simple_net_forward.1} parent=0 // pred_check_branch
    %78 = sbr.rel (0) target = $region13
  $region12: #{simple_net_forward.1} parent=0 // pred_region
    _
  $region13: #{simple_net_forward.1} parent=0 // pred_fallthru
    _
  // Predicated region
  $region14: #{simple_net_forward.1} parent=0 // pred_check
    _
  $region15: #{simple_net_forward.1} parent=0 // pred_check_branch
    %80 = sbr.rel (0) target = $region17
  $region16: #{simple_net_forward.1} parent=0 // pred_region
    _
  $region17: #{simple_net_forward.1} parent=0 // pred_fallthru
    _

</llo_original>
